<compile_context>
chip_gen: v7x
topology: tpu7x:2x2x1
jax: 0.10.0
libtpu: 0.0.40
codegen_flags: <defaults>
</compile_context>

<pallas_src>
import functools
import math

import jax
import jax.numpy as jnp
from jax.experimental import pallas as pl
from jax.experimental.pallas import tpu as pltpu


# ----------------------------------------------------------------------------
# Kernel: one batch element per grid step.
# ----------------------------------------------------------------------------
def _channel_select2_kernel(x_ref, y_ref, p_ref, f_ref, o_ref, *, C, r, use_mxu):
    """Per-step shapes:
       x_ref / y_ref / o_ref : (C*r, HW//r)  sublane-folded per-batch slab
       p_ref : (2C+3, 2C)  packed conv params (f32), resident across steps
       f_ref : (C*r, C)    fold/expand indicator matrix (f32), resident
    """
    C2 = 2 * C
    inv_r = 1.0 / r

    x = x_ref[...]                                    # (C*r, HW/r), input dtype
    y = y_ref[...]

    # --- AdaptiveAvgPool2d(1): spatial mean per channel, accumulated in f32. ---
    row_mean_x = jnp.mean(x.astype(jnp.float32), axis=-1, keepdims=True)   # (C*r, 1)
    row_mean_y = jnp.mean(y.astype(jnp.float32), axis=-1, keepdims=True)   # (C*r, 1)

    F = f_ref[...]                                    # (C*r, C): F[i, c] = (i//r == c)
    ch_x = jnp.sum(row_mean_x * F, axis=0, keepdims=True) * inv_r          # (1, C)
    ch_y = jnp.sum(row_mean_y * F, axis=0, keepdims=True) * inv_r          # (1, C)
    pooled = jnp.concatenate([ch_x, ch_y], axis=1)                         # (1, 2C)

    # --- unpack the consolidated parameter buffer (all f32). ---
    pw_t = p_ref[0:C2, :]                             # (2C_in, 2C_out) point_conv W^T
    dw_w = p_ref[C2:C2 + 1, :]                        # (1, 2C) depthwise 1x1 weight
    dw_b = p_ref[C2 + 1:C2 + 2, :]                    # (1, 2C) depthwise bias
    pw_b = p_ref[C2 + 2:C2 + 3, :]                    # (1, 2C) pointwise bias

    # depth_conv: 1x1, groups=2C -> per-channel scale + bias.
    z = pooled * dw_w + dw_b                          # (1, 2C)

    # point_conv: dense 1x1 across channels.
    if use_mxu:
        # Large channel counts: contract on the MXU.
        z2 = jnp.dot(z, pw_t, preferred_element_type=jnp.float32) + pw_b
    else:
        # Tiny channel counts: broadcast-mul + reduce on the VPU/XLU.
        z2 = jnp.sum(z[:, :, None] * pw_t[None, :, :], axis=1) + pw_b      # (1, 2C)

    # softmax over channels (exact), then sigmoid.
    m = jnp.max(z2, axis=1, keepdims=True)
    e = jnp.exp(z2 - m)
    s = jnp.sum(e, axis=1, keepdims=True)
    ca = jax.nn.sigmoid(e / s)                        # (1, 2C), f32

    cax = ca[:, :C]                                   # (1, C) gain for x channels
    cay = ca[:, C:]                                   # (1, C) gain for y channels

    # Expand per-channel gains to per-(folded-)row gains; cast back to compute dtype.
    sx = jnp.sum(F * cax, axis=1, keepdims=True).astype(x.dtype)           # (C*r, 1)
    sy = jnp.sum(F * cay, axis=1, keepdims=True).astype(y.dtype)           # (C*r, 1)

    o_ref[...] = (x * sx + y * sy).astype(o_ref.dtype)


# ----------------------------------------------------------------------------
# Wrapper: layout plumbing (free views) + grid / BlockSpec construction.
# ----------------------------------------------------------------------------
def _fold_factor(C, HW, itemsize):
    """Fold r rows of HW into the sublane axis so C*r fills the sublane granule."""
    sub = max(1, 32 // itemsize)          # 8 rows for f32, 16 for bf16
    if C % sub == 0:
        return 1
    r = sub // math.gcd(C, sub)
    if HW % r == 0 and (HW // r) % 128 == 0:
        return r
    return 1


@jax.jit
def channel_select2(x, y, dw_w, dw_b, pw_w, pw_b):
    B, C, H, W = x.shape
    HW = H * W
    C2 = 2 * C
    itemsize = jnp.dtype(x.dtype).itemsize

    r = _fold_factor(C, HW, itemsize)
    Cr, HWr = C * r, HW // r

    # Row-major contiguous -> pure views (no data movement). Row i of the folded
    # slab belongs to channel i // r; its HWr elements are a contiguous chunk of
    # that channel's H*W pixels.
    x3 = x.reshape(B, Cr, HWr)
    y3 = y.reshape(B, Cr, HWr)

    # Pack all parameters into one small resident f32 buffer:
    #   rows [0, 2C) : point_conv weight, transposed -> (2C_in, 2C_out)
    #   row  2C      : depth_conv per-channel weight
    #   row  2C + 1  : depth_conv bias
    #   row  2C + 2  : point_conv bias
    params = jnp.concatenate(
        [pw_w.T, dw_w[None, :], dw_b[None, :], pw_b[None, :]], axis=0
    ).astype(jnp.float32)                                                  # (2C+3, 2C)

    # Fold/expand indicator matrix: F[i, c] = 1 iff folded row i maps to channel c.
    rows = jnp.arange(Cr, dtype=jnp.int32) // r
    fold = (rows[:, None] == jnp.arange(C, dtype=jnp.int32)[None, :]).astype(jnp.float32)

    # Explicit VMEM budget: 3 slabs (x, y, out) x 2 pipeline buffers + headroom.
    block_bytes = Cr * HWr * itemsize
    vmem_limit = int(min(96 * 2**20, max(32 * 2**20, 8 * block_bytes)))

    kernel = functools.partial(
        _channel_select2_kernel, C=C, r=r, use_mxu=(C2 >= 128))

    out = pl.pallas_call(
        kernel,
        grid=(B,),
        in_specs=[
            pl.BlockSpec((None, Cr, HWr), lambda b: (b, 0, 0)),    # x slab, per batch
            pl.BlockSpec((None, Cr, HWr), lambda b: (b, 0, 0)),    # y slab, per batch
            pl.BlockSpec((C2 + 3, C2), lambda b: (0, 0)),          # params, resident
            pl.BlockSpec((Cr, C), lambda b: (0, 0)),               # fold matrix, resident
        ],
        out_specs=pl.BlockSpec((None, Cr, HWr), lambda b: (b, 0, 0)),
        out_shape=jax.ShapeDtypeStruct((B, Cr, HWr), x.dtype),
        compiler_params=pltpu.CompilerParams(
            dimension_semantics=("parallel",),        # shard batch across v7x cores
            vmem_limit_bytes=vmem_limit,
        ),
    )(x3, y3, params, fold)

    return out.reshape(B, C, H, W)


# ----------------------------------------------------------------------------
# Pure-JAX reference (mirrors the PyTorch module exactly).
# ----------------------------------------------------------------------------
def channel_select2_ref(x, y, dw_w, dw_b, pw_w, pw_b):
    B, C, H, W = x.shape
    xy = jnp.concatenate([x, y], axis=1)                       # (B, 2C, H, W)
    pooled = jnp.mean(xy, axis=(2, 3))                         # AdaptiveAvgPool2d(1)
    z = pooled * dw_w + dw_b                                   # depthwise 1x1 (groups=2C)
    z2 = z @ pw_w.T + pw_b                                     # pointwise 1x1
    ca = jax.nn.sigmoid(jax.nn.softmax(z2, axis=1))            # (B, 2C)
    cax = ca[:, :C, None, None]
    cay = ca[:, C:, None, None]
    return x * cax + y * cay


# ----------------------------------------------------------------------------
if __name__ == "__main__":
    B, C, H, W = 2, 4, 16, 16          # x, y: (B, C, H, W); concat channels = 2C = 8
    C2 = 2 * C

    key = jax.random.PRNGKey(0)
    kx, ky, k1, k2, k3, k4 = jax.random.split(key, 6)
    x = jax.random.normal(kx, (B, C, H, W), jnp.float32)
    y = jax.random.normal(ky, (B, C, H, W), jnp.float32)

    # Parameters (PyTorch shapes: depth_conv (2C,1,1,1)+(2C,), point_conv (2C,2C,1,1)+(2C,)).
    dw_w = 0.5 * jax.random.normal(k1, (C2,), jnp.float32)
    dw_b = 0.1 * jax.random.normal(k2, (C2,), jnp.float32)
    pw_w = 0.5 * jax.random.normal(k3, (C2, C2), jnp.float32)
    pw_b = 0.1 * jax.random.normal(k4, (C2,), jnp.float32)

    out = jax.block_until_ready(channel_select2(x, y, dw_w, dw_b, pw_w, pw_b))
    ref = channel_select2_ref(x, y, dw_w, dw_b, pw_w, pw_b)

    assert out.shape == (B, C, H, W), out.shape
    assert jnp.all(jnp.isfinite(out))
    max_err = float(jnp.max(jnp.abs(out - ref)))
    assert jnp.allclose(out, ref, rtol=1e-4, atol=1e-4), max_err
    print("KERNEL_OK")
</pallas_src>

<mosaic_0001>
module attributes {stable_mosaic.version = 11 : i64} {
  func.func @_channel_select2_kernel(%arg0: i32, %arg1: memref<1x8x128xf32, #tpu.memory_space<vmem>>, %arg2: memref<1x8x128xf32, #tpu.memory_space<vmem>>, %arg3: memref<11x8xf32, #tpu.memory_space<vmem>>, %arg4: memref<8x4xf32, #tpu.memory_space<vmem>>, %arg5: memref<1x8x128xf32, #tpu.memory_space<vmem>>) attributes {dimension_semantics = [#tpu.dimension_semantics<parallel>], iteration_bounds = array<i64: 2>, scalar_prefetch = 0 : i64, scratch_operands = 0 : i64, tpu.core_type = #tpu.core_type<tc>, window_params = [{transform_indices = @transform_0, window_bounds = array<i64: 1, 8, 128>}, {transform_indices = @transform_1, window_bounds = array<i64: 1, 8, 128>}, {pipeline_mode = #tpu.pipeline_mode<synchronous>, transform_indices = @transform_2, window_bounds = array<i64: 11, 8>}, {pipeline_mode = #tpu.pipeline_mode<synchronous>, transform_indices = @transform_3, window_bounds = array<i64: 8, 4>}, {transform_indices = @transform_4, window_bounds = array<i64: 1, 8, 128>}]} {
    %c0 = arith.constant 0 : index
    %c0_0 = arith.constant 0 : index
    %c0_1 = arith.constant 0 : index
    %0 = vector.load %arg1[%c0, %c0_0, %c0_1] : memref<1x8x128xf32, #tpu.memory_space<vmem>>, vector<1x8x128xf32>
    %1 = vector.shape_cast %0 : vector<1x8x128xf32> to vector<8x128xf32>
    %c0_2 = arith.constant 0 : index
    %c0_3 = arith.constant 0 : index
    %c0_4 = arith.constant 0 : index
    %2 = vector.load %arg2[%c0_2, %c0_3, %c0_4] : memref<1x8x128xf32, #tpu.memory_space<vmem>>, vector<1x8x128xf32>
    %3 = vector.shape_cast %2 : vector<1x8x128xf32> to vector<8x128xf32>
    %cst = arith.constant dense<0.000000e+00> : vector<8xf32>
    %4 = vector.multi_reduction <add>, %1, %cst [1] : vector<8x128xf32> to vector<8xf32>
    %5 = vector.shape_cast %4 : vector<8xf32> to vector<8x1xf32>
    %cst_5 = arith.constant 1.280000e+02 : f32
    %6 = vector.broadcast %cst_5 : f32 to vector<8x1xf32>
    %7 = arith.divf %5, %6 : vector<8x1xf32>
    %cst_6 = arith.constant dense<0.000000e+00> : vector<8xf32>
    %8 = vector.multi_reduction <add>, %3, %cst_6 [1] : vector<8x128xf32> to vector<8xf32>
    %9 = vector.shape_cast %8 : vector<8xf32> to vector<8x1xf32>
    %cst_7 = arith.constant 1.280000e+02 : f32
    %10 = vector.broadcast %cst_7 : f32 to vector<8x1xf32>
    %11 = arith.divf %9, %10 : vector<8x1xf32>
    %c0_8 = arith.constant 0 : index
    %c0_9 = arith.constant 0 : index
    %12 = vector.load %arg4[%c0_8, %c0_9] : memref<8x4xf32, #tpu.memory_space<vmem>>, vector<8x4xf32>
    %13 = vector.broadcast %7 : vector<8x1xf32> to vector<8x4xf32>
    %14 = arith.mulf %13, %12 : vector<8x4xf32>
    %cst_10 = arith.constant dense<0.000000e+00> : vector<4xf32>
    %15 = vector.multi_reduction <add>, %14, %cst_10 [0] : vector<8x4xf32> to vector<4xf32>
    %16 = vector.shape_cast %15 : vector<4xf32> to vector<1x4xf32>
    %cst_11 = arith.constant 5.000000e-01 : f32
    %17 = vector.broadcast %cst_11 : f32 to vector<1x4xf32>
    %18 = arith.mulf %16, %17 : vector<1x4xf32>
    %19 = vector.broadcast %11 : vector<8x1xf32> to vector<8x4xf32>
    %20 = arith.mulf %19, %12 : vector<8x4xf32>
    %cst_12 = arith.constant dense<0.000000e+00> : vector<4xf32>
    %21 = vector.multi_reduction <add>, %20, %cst_12 [0] : vector<8x4xf32> to vector<4xf32>
    %22 = vector.shape_cast %21 : vector<4xf32> to vector<1x4xf32>
    %cst_13 = arith.constant 5.000000e-01 : f32
    %23 = vector.broadcast %cst_13 : f32 to vector<1x4xf32>
    %24 = arith.mulf %22, %23 : vector<1x4xf32>
    %25 = tpu.concatenate %18, %24 in 1 : vector<1x4xf32>, vector<1x4xf32> -> vector<1x8xf32>
    %c0_14 = arith.constant 0 : index
    %c0_15 = arith.constant 0 : index
    %26 = vector.load %arg3[%c0_14, %c0_15] : memref<11x8xf32, #tpu.memory_space<vmem>>, vector<8x8xf32>
    %c8 = arith.constant 8 : index
    %c0_16 = arith.constant 0 : index
    %27 = vector.load %arg3[%c8, %c0_16] : memref<11x8xf32, #tpu.memory_space<vmem>>, vector<1x8xf32>
    %c9 = arith.constant 9 : index
    %c0_17 = arith.constant 0 : index
    %28 = vector.load %arg3[%c9, %c0_17] : memref<11x8xf32, #tpu.memory_space<vmem>>, vector<1x8xf32>
    %c10 = arith.constant 10 : index
    %c0_18 = arith.constant 0 : index
    %29 = vector.load %arg3[%c10, %c0_18] : memref<11x8xf32, #tpu.memory_space<vmem>>, vector<1x8xf32>
    %30 = arith.mulf %25, %27 : vector<1x8xf32>
    %31 = arith.addf %30, %28 : vector<1x8xf32>
    %32 = vector.shape_cast %31 : vector<1x8xf32> to vector<1x8x1xf32>
    %33 = vector.shape_cast %26 : vector<8x8xf32> to vector<1x8x8xf32>
    %34 = vector.broadcast %32 : vector<1x8x1xf32> to vector<1x8x8xf32>
    %35 = arith.mulf %34, %33 : vector<1x8x8xf32>
    %cst_19 = arith.constant dense<0.000000e+00> : vector<1x8xf32>
    %36 = vector.multi_reduction <add>, %35, %cst_19 [1] : vector<1x8x8xf32> to vector<1x8xf32>
    %37 = arith.addf %36, %29 : vector<1x8xf32>
    %cst_20 = arith.constant dense<0xFF800000> : vector<1xf32>
    %38 = vector.multi_reduction <maximumf>, %37, %cst_20 [1] : vector<1x8xf32> to vector<1xf32>
    %39 = vector.shape_cast %38 : vector<1xf32> to vector<1x1xf32>
    %40 = vector.broadcast %39 : vector<1x1xf32> to vector<1x8xf32>
    %41 = arith.subf %37, %40 : vector<1x8xf32>
    %42 = math.exp %41 : vector<1x8xf32>
    %cst_21 = arith.constant dense<0.000000e+00> : vector<1xf32>
    %43 = vector.multi_reduction <add>, %42, %cst_21 [1] : vector<1x8xf32> to vector<1xf32>
    %44 = vector.shape_cast %43 : vector<1xf32> to vector<1x1xf32>
    %45 = vector.broadcast %44 : vector<1x1xf32> to vector<1x8xf32>
    %46 = arith.divf %42, %45 : vector<1x8xf32>
    %47 = arith.negf %46 : vector<1x8xf32>
    %48 = math.exp %47 : vector<1x8xf32>
    %cst_22 = arith.constant 1.000000e+00 : f32
    %49 = vector.broadcast %cst_22 : f32 to vector<1x8xf32>
    %50 = arith.addf %49, %48 : vector<1x8xf32>
    %51 = arith.divf %49, %50 : vector<1x8xf32>
    %52 = vector.extract_strided_slice %51 {offsets = [0, 0], sizes = [1, 4], strides = [1, 1]} : vector<1x8xf32> to vector<1x4xf32>
    %53 = vector.extract_strided_slice %51 {offsets = [0, 4], sizes = [1, 4], strides = [1, 1]} : vector<1x8xf32> to vector<1x4xf32>
    %54 = vector.broadcast %52 : vector<1x4xf32> to vector<8x4xf32>
    %55 = arith.mulf %12, %54 : vector<8x4xf32>
    %cst_23 = arith.constant dense<0.000000e+00> : vector<8xf32>
    %56 = vector.multi_reduction <add>, %55, %cst_23 [1] : vector<8x4xf32> to vector<8xf32>
    %57 = vector.shape_cast %56 : vector<8xf32> to vector<8x1xf32>
    %58 = vector.broadcast %53 : vector<1x4xf32> to vector<8x4xf32>
    %59 = arith.mulf %12, %58 : vector<8x4xf32>
    %cst_24 = arith.constant dense<0.000000e+00> : vector<8xf32>
    %60 = vector.multi_reduction <add>, %59, %cst_24 [1] : vector<8x4xf32> to vector<8xf32>
    %61 = vector.shape_cast %60 : vector<8xf32> to vector<8x1xf32>
    %62 = vector.broadcast %57 : vector<8x1xf32> to vector<8x128xf32>
    %63 = arith.mulf %1, %62 : vector<8x128xf32>
    %64 = vector.broadcast %61 : vector<8x1xf32> to vector<8x128xf32>
    %65 = arith.mulf %3, %64 : vector<8x128xf32>
    %66 = arith.addf %63, %65 : vector<8x128xf32>
    %c0_25 = arith.constant 0 : index
    %c0_26 = arith.constant 0 : index
    %c0_27 = arith.constant 0 : index
    %67 = vector.load %arg5[%c0_25, %c0_26, %c0_27] : memref<1x8x128xf32, #tpu.memory_space<vmem>>, vector<1x8x128xf32>
    %68 = vector.shape_cast %67 : vector<1x8x128xf32> to vector<8x128xf32>
    %69 = vector.shape_cast %66 : vector<8x128xf32> to vector<1x8x128xf32>
    tpu.vector_store %arg5[%c0_25, %c0_26, %c0_27], %69 {strides = array<i32>} : memref<1x8x128xf32, #tpu.memory_space<vmem>>, vector<1x8x128xf32>,
    return
  }
  func.func @transform_0(%arg0: i32) -> (i32, i32, i32) {
    %c0_i32 = arith.constant 0 : i32
    %c0_i32_0 = arith.constant 0 : i32
    %c0_i32_1 = arith.constant 0 : i32
    return %arg0, %c0_i32, %c0_i32_0 : i32, i32, i32
  }
  func.func @transform_1(%arg0: i32) -> (i32, i32, i32) {
    %c0_i32 = arith.constant 0 : i32
    %c0_i32_0 = arith.constant 0 : i32
    %c0_i32_1 = arith.constant 0 : i32
    return %arg0, %c0_i32, %c0_i32_0 : i32, i32, i32
  }
  func.func @transform_2(%arg0: i32) -> (i32, i32) {
    %c0_i32 = arith.constant 0 : i32
    %c0_i32_0 = arith.constant 0 : i32
    %c0_i32_1 = arith.constant 0 : i32
    return %c0_i32, %c0_i32_0 : i32, i32
  }
  func.func @transform_3(%arg0: i32) -> (i32, i32) {
    %c0_i32 = arith.constant 0 : i32
    %c0_i32_0 = arith.constant 0 : i32
    %c0_i32_1 = arith.constant 0 : i32
    return %c0_i32, %c0_i32_0 : i32, i32
  }
  func.func @transform_4(%arg0: i32) -> (i32, i32, i32) {
    %c0_i32 = arith.constant 0 : i32
    %c0_i32_0 = arith.constant 0 : i32
    %c0_i32_1 = arith.constant 0 : i32
    return %arg0, %c0_i32, %c0_i32_0 : i32, i32, i32
  }
}

</mosaic_0001>

<llo_original>
// kernel: channel_select2.1
$region0: #{channel_select2.1}
  #allocation0 [shape = 'u32[]', space=smem, size = 0x4, offset = 0x4, fixed_abs, tag = 'smem constant byte address 0x4 - core index']
  #allocation1 [shape = 'u32[144,128]{1,0:T(1,128)}', space=vmem, size = 0x12000, scoped, tag = 'internal scratch']
  %s0 = inlined_call_operand.vmem [shape: f32[2,8,128], index: 0, kind: input, shape index: {}]
  %s1 = inlined_call_operand.vmem [shape: f32[2,8,128], index: 1, kind: input, shape index: {}]
  %s2 = inlined_call_operand.vmem [shape: f32[11,8], index: 2, kind: input, shape index: {}]
  %s3 = inlined_call_operand.vmem [shape: f32[8,4], index: 3, kind: input, shape index: {}]
  %s4 = inlined_call_operand.vmem [shape: f32[2,8,128], index: 4, kind: output, shape index: {}]
  %s5 = sld [smem:[#allocation0]]
  $region49: #{channel_select2.1} parent=0
    _
  %s7 = ssub.s32 1, %s5
  %s8 = scalar_select 0, %s7, %s5
  loop: start=0, step=1, limit=4
  $region2: #{channel_select2.1} parent=0 // loop_pre_header
    _
  $region3: #{channel_select2.1} parent=0 // loop_header
    %s10 = sphi 0, %s14
    %p11 = scmp.ge.s32.totalorder %s10, 4
    %s20 = sphi 0, %s22
    %s23 = sphi 0, %s20
    %s24 = sphi 0, %s23
    %s40 = sphi 0, %s24
    %s46 = sphi 0, %s48
    %s49 = sphi 0, %s46
    %s50 = sphi 0, %s49
    %s66 = sphi 0, %s50
    %s70 = sphi 0, %s70
    %s72 = sphi 0, %s70
    %s73 = sphi 0, %s72
    %s87 = sphi 0, %s73
    %s91 = sphi 0, %s91
    %s93 = sphi 0, %s91
    %s94 = sphi 0, %s93
    %s108 = sphi 0, %s94
    %s114 = sphi 0, %s116
    %s117 = sphi 0, %s114
    %s118 = sphi 0, %s117
    %s134 = sphi 0, %s118
  $region4: #{channel_select2.1} parent=0 // loop_header_branch
    %13 = sbr.rel (%p11) target = $region8
  $region5: #{channel_select2.1} parent=0 // loop_body
    %s15 = ssub.s32 %s10, 1
    %s16 = ssub.s32 %s10, 2
    %s17 = sadd.s32 %s10, 1
    %s18 = ssub.s32 %s10, %s17
    %p19 = scmp.eq.s32.totalorder %s18, 0
    %s21 = sadd.s32 %s20, 1
    %s22 = scalar_select %p19, %s20, %s21
    %p25 = pneg %p19
    %p26 = scmp.eq.s32.totalorder %s10, 1
    %p27 = por %p25, %p26
    %p28 = scmp.ne.s32.totalorder %s20, %s23
    %p29 = scmp.eq.s32.totalorder %s10, 0
    %p30 = por %p28, %p29
    %p31 = scmp.ne.s32.totalorder %s20, %s23
    %p32 = scmp.eq.s32.totalorder %s15, 1
    %p33 = por %p31, %p32
    %p34 = scmp.ne.s32.totalorder %s23, %s24
    %p35 = scmp.eq.s32.totalorder %s15, 0
    %p36 = por %p34, %p35
    %p37 = scmp.ne.s32.totalorder %s23, %s24
    %p38 = scmp.eq.s32.totalorder %s16, 1
    %p39 = por %p37, %p38
    %p41 = scmp.ne.s32.totalorder %s24, %s40
    %p42 = scmp.eq.s32.totalorder %s16, 0
    %p43 = por %p41, %p42
    %s44 = ssub.s32 %s10, %s17
    %p45 = scmp.eq.s32.totalorder %s44, 0
    %s47 = sadd.s32 %s46, 1
    %s48 = scalar_select %p45, %s46, %s47
    %p51 = pneg %p45
    %p52 = scmp.eq.s32.totalorder %s10, 1
    %p53 = por %p51, %p52
    %p54 = scmp.ne.s32.totalorder %s46, %s49
    %p55 = scmp.eq.s32.totalorder %s10, 0
    %p56 = por %p54, %p55
    %p57 = scmp.ne.s32.totalorder %s46, %s49
    %p58 = scmp.eq.s32.totalorder %s15, 1
    %p59 = por %p57, %p58
    %p60 = scmp.ne.s32.totalorder %s49, %s50
    %p61 = scmp.eq.s32.totalorder %s15, 0
    %p62 = por %p60, %p61
    %p63 = scmp.ne.s32.totalorder %s49, %s50
    %p64 = scmp.eq.s32.totalorder %s16, 1
    %p65 = por %p63, %p64
    %p67 = scmp.ne.s32.totalorder %s50, %s66
    %p68 = scmp.eq.s32.totalorder %s16, 0
    %p69 = por %p67, %p68
    %s71 = sadd.s32 %s70, 1
    %p74 = scmp.eq.s32.totalorder %s10, 1
    %p75 = scmp.ne.s32.totalorder %s70, %s72
    %p76 = scmp.eq.s32.totalorder %s10, 0
    %p77 = por %p75, %p76
    %p78 = scmp.ne.s32.totalorder %s70, %s72
    %p79 = scmp.eq.s32.totalorder %s15, 1
    %p80 = por %p78, %p79
    %p81 = scmp.ne.s32.totalorder %s72, %s73
    %p82 = scmp.eq.s32.totalorder %s15, 0
    %p83 = por %p81, %p82
    %p84 = scmp.ne.s32.totalorder %s72, %s73
    %p85 = scmp.eq.s32.totalorder %s16, 1
    %p86 = por %p84, %p85
    %p88 = scmp.ne.s32.totalorder %s73, %s87
    %p89 = scmp.eq.s32.totalorder %s16, 0
    %p90 = por %p88, %p89
    %s92 = sadd.s32 %s91, 1
    %p95 = scmp.eq.s32.totalorder %s10, 1
    %p96 = scmp.ne.s32.totalorder %s91, %s93
    %p97 = scmp.eq.s32.totalorder %s10, 0
    %p98 = por %p96, %p97
    %p99 = scmp.ne.s32.totalorder %s91, %s93
    %p100 = scmp.eq.s32.totalorder %s15, 1
    %p101 = por %p99, %p100
    %p102 = scmp.ne.s32.totalorder %s93, %s94
    %p103 = scmp.eq.s32.totalorder %s15, 0
    %p104 = por %p102, %p103
    %p105 = scmp.ne.s32.totalorder %s93, %s94
    %p106 = scmp.eq.s32.totalorder %s16, 1
    %p107 = por %p105, %p106
    %p109 = scmp.ne.s32.totalorder %s94, %s108
    %p110 = scmp.eq.s32.totalorder %s16, 0
    %p111 = por %p109, %p110
    %s112 = ssub.s32 %s10, %s17
    %p113 = scmp.eq.s32.totalorder %s112, 0
    %s115 = sadd.s32 %s114, 1
    %s116 = scalar_select %p113, %s114, %s115
    %p119 = pneg %p113
    %p120 = scmp.eq.s32.totalorder %s10, 1
    %p121 = por %p119, %p120
    %p122 = scmp.ne.s32.totalorder %s114, %s117
    %p123 = scmp.eq.s32.totalorder %s10, 0
    %p124 = por %p122, %p123
    %p125 = scmp.ne.s32.totalorder %s114, %s117
    %p126 = scmp.eq.s32.totalorder %s15, 1
    %p127 = por %p125, %p126
    %p128 = scmp.ne.s32.totalorder %s117, %s118
    %p129 = scmp.eq.s32.totalorder %s15, 0
    %p130 = por %p128, %p129
    %p131 = scmp.ne.s32.totalorder %s117, %s118
    %p132 = scmp.eq.s32.totalorder %s16, 1
    %p133 = por %p131, %p132
    %p135 = scmp.ne.s32.totalorder %s118, %s134
    %p136 = scmp.eq.s32.totalorder %s16, 0
    %p137 = por %p135, %p136
    %p138 = scmp.le.s32.totalorder 1, %s10
    %p139 = scmp.lt.s32.totalorder %s10, 3
    %p140 = pnand %p138, %p139
    %p141 = pneg %p140
    // Predicated region
    $region9: #{channel_select2.1} parent=5 // pred_check
      _
    $region10: #{channel_select2.1} parent=5 // pred_check_branch
      %143 = sbr.rel (%p140) target = $region12
    $region11: #{channel_select2.1} parent=5 // pred_region
      %s144 = ssub.s32 %s10, 1
      // Predicated region
      $region13: #{channel_select2.1} parent=11 // pred_check
        %p145 = pneg %p83
      $region14: #{channel_select2.1} parent=11 // pred_check_branch
        %147 = sbr.rel (%p145) target = $region16
      $region15: #{channel_select2.1} parent=11 // pred_region
        _
      $region16: #{channel_select2.1} parent=11 // pred_fallthru
        _
      // Predicated region
      $region17: #{channel_select2.1} parent=11 // pred_check
        %p148 = pneg %p104
      $region18: #{channel_select2.1} parent=11 // pred_check_branch
        %150 = sbr.rel (%p148) target = $region20
      $region19: #{channel_select2.1} parent=11 // pred_region
        _
      $region20: #{channel_select2.1} parent=11 // pred_fallthru
        _
    $region12: #{channel_select2.1} parent=5 // pred_fallthru
      _
    %p151 = scmp.lt.s32.totalorder %s10, 2
    // Predicated region
    $region21: #{channel_select2.1} parent=5 // pred_check
      %p152 = pneg %p151
    $region22: #{channel_select2.1} parent=5 // pred_check_branch
      %154 = sbr.rel (%p152) target = $region24
    $region23: #{channel_select2.1} parent=5 // pred_region
      // Predicated region
      $region25: #{channel_select2.1} parent=23 // pred_check
        %p155 = pneg %p30
      $region26: #{channel_select2.1} parent=23 // pred_check_branch
        %157 = sbr.rel (%p155) target = $region28
      $region27: #{channel_select2.1} parent=23 // pred_region
        %p158 = scmp.lt.s32.totalorder %s10, 1
        %s159 = scalar_select %p158, %s10, 1
        %s160 = smul.addr %s159, 8
        %s161 = scalar_lea.vmem %s0, %s160
      $region28: #{channel_select2.1} parent=23 // pred_fallthru
        _
      // Predicated region
      $region29: #{channel_select2.1} parent=23 // pred_check
        %p162 = pneg %p56
      $region30: #{channel_select2.1} parent=23 // pred_check_branch
        %164 = sbr.rel (%p162) target = $region32
      $region31: #{channel_select2.1} parent=23 // pred_region
        %p165 = scmp.lt.s32.totalorder %s10, 1
        %s166 = scalar_select %p165, %s10, 1
        %s167 = smul.addr %s166, 8
        %s168 = scalar_lea.vmem %s1, %s167
      $region32: #{channel_select2.1} parent=23 // pred_fallthru
        _
    $region24: #{channel_select2.1} parent=5 // pred_fallthru
      _
    %p169 = scmp.le.s32.totalorder 1, %s10
    %p170 = scmp.lt.s32.totalorder %s10, 3
    %p171 = pnand %p169, %p170
    %p172 = pneg %p171
    // Predicated region
    $region33: #{channel_select2.1} parent=5 // pred_check
      _
    $region34: #{channel_select2.1} parent=5 // pred_check_branch
      %174 = sbr.rel (%p171) target = $region36
    $region35: #{channel_select2.1} parent=5 // pred_region
      %s175 = ssub.s32 %s10, 1
      %p176 = scmp.lt.s32.totalorder %s15, 1
      %s177 = scalar_select %p176, %s15, 1
      %s178 = smul.addr %s177, 8
      %s179 = scalar_lea.vmem %s0, %s178
      %p180 = pneg %p36
      %p181 = pneg %p33
      %p182 = scmp.lt.s32.totalorder %s15, 1
      %s183 = scalar_select %p182, %s15, 1
      %s184 = smul.addr %s183, 8
      %s185 = scalar_lea.vmem %s1, %s184
      %p186 = pneg %p62
      %p187 = pneg %p59
      %p188 = pneg %p83
      %p189 = pneg %p80
      %p190 = pneg %p104
      %p191 = pneg %p101
      %p192 = pneg %p130
      %p193 = pneg %p127
      %p194 = scmp.lt.s32.totalorder %s15, 1
      %s195 = scalar_select %p194, %s15, 1
      %s196 = smul.addr %s195, 8
      %s197 = scalar_lea.vmem %s4, %s196
      %p198 = scmp.lt.s32.totalorder %s15, 1
      %s199 = scalar_select %p198, %s15, 1
      %s200 = smul.addr %s199, 8
      %s201 = scalar_lea.vmem %s0, %s200
      %p202 = scmp.lt.s32.totalorder %s15, 1
      %s203 = scalar_select %p202, %s15, 1
      %s204 = smul.addr %s203, 8
      %s205 = scalar_lea.vmem %s1, %s204
      %p206 = scmp.lt.s32.totalorder %s15, 1
      %s207 = scalar_select %p206, %s15, 1
      %s208 = smul.addr %s207, 8
      %s209 = scalar_lea.vmem %s4, %s208
      %v210 = vld [vmem:[%s201] sm:$0xff]
      %v211 = vld [vmem:[%s205] sm:$0xff]
      %212 = vadd.xlane.f32.xlu0 %v210
      %v213 = vpop.xlane.xlu0 %212
      %v214 = vrcp.pop 128.0
      %v215 = vmul.f32 %v213, %v214
      %216 = vadd.xlane.f32.xlu0 %v211
      %v217 = vpop.xlane.xlu0 %216
      %v218 = vmul.f32 %v217, %v214
      %v219 = vld [vmem:[%s3] sm:$0xff]
      %v220 = vmul.f32 %v215, %v219
      %vm221 = vcmask 31744
      %v222 = vsel %vm221, %v220, 0.0
      %v223 = vrot.slane %v222, 4
      %v224 = vadd.f32 %v222, %v223
      %v225 = vrot.slane %v224, 2
      %v226 = vadd.f32 %v224, %v225
      %v227 = vrot.slane %v226, 1
      %v228 = vadd.f32 %v226, %v227
      %v229 = vmul.f32 %v228, 0.5
      %v230 = vmul.f32 %v218, %v219
      %v231 = vsel %vm221, %v230, 0.0
      %v232 = vrot.slane %v231, 4
      %v233 = vadd.f32 %v231, %v232
      %v234 = vrot.slane %v233, 2
      %v235 = vadd.f32 %v233, %v234
      %v236 = vrot.slane %v235, 1
      %v237 = vadd.f32 %v235, %v236
      %v238 = vmul.f32 %v237, 0.5
      %240 = vrot.lane.b32.xlu0 %v238, 4
      %v241 = vpop.permute.xlu0 %240
      %v243 = vsel %vm221, %v229, %v241
      %v244 = vld [vmem:[%s2] sm:$0xff]
      %v245 = vld [vmem:[%s2 + $0x8] sm:$0x1]
      %v246 = vld [vmem:[%s2 + $0x9] sm:$0x1]
      %v247 = vld [vmem:[%s2 + $0xa] sm:$0x1]
      %v248 = vmul.f32 %v243, %v245
      %v249 = vadd.f32 %v248, %v246
      %v250 = vlaneseq
      %v251 = vshrl.u32 %v250, 7
      %v252 = vsub.s32 0, %v251
      %v253 = vrot.slane %v249, %v252
      %255 = vbcast.lane.b32.xlu0 %v253, 256
      %v256 = vpop.permute.xlu0 %255
      %v257 = vmul.f32 %v256, %v244
      %vm258 = vcmask 64512
      %v259 = vsel %vm258, %v257, 0.0
      %v260 = vrot.slane %v259, 4
      %v261 = vadd.f32 %v259, %v260
      %v262 = vrot.slane %v261, 2
      %v263 = vadd.f32 %v261, %v262
      %v264 = vrot.slane %v263, 1
      %v265 = vadd.f32 %v263, %v264
      %v266 = vadd.f32 %v265, %v247
      %vm267 = vcmask 57344
      %v268 = vsel %vm267, %v266, -inf
      %269 = vmax.xlane.f32.xlu0 %v268
      %v270 = vpop.xlane.xlu0 %269
      %v271 = vsub.f32 %v266, %v270
      %v272 = vmul.f32 %v271, 1.442695
      %v273 = vpow.pop %v272
      %v274 = vsel %vm267, %v273, 0.0
      %275 = vadd.xlane.f32.xlu0 %v274
      %v276 = vpop.xlane.xlu0 %275
      %v277 = vrcp.pop %v276
      %v278 = vmul.f32 %v273, %v277
      %v279 = vxor.u32 %v278, 2147483648
      %v280 = vmul.f32 %v279, 1.442695
      %v281 = vpow.pop %v280
      %v282 = vadd.f32 %v281, 1.0
      %v283 = vrcp.pop %v282
      %v284 = vmul.f32 1.0, %v283
      %v285 = vlaneseq
      %v286 = vshrl.u32 %v285, 7
      %v287 = vsub.s32 0, %v286
      %v288 = vrot.slane %v284, %v287
      %v289 = vmul.f32 %v219, %v288
      %v290 = vsel %vm221, %v289, 0.0
      %291 = vadd.xlane.f32.xlu0 %v290
      %v292 = vpop.xlane.xlu0 %291
      %294 = vrot.lane.b32.xlu0 %v288, 124
      %v295 = vpop.permute.xlu0 %294
      %v297 = vmul.f32 %v219, %v295
      %v298 = vsel %vm221, %v297, 0.0
      %299 = vadd.xlane.f32.xlu0 %v298
      %v300 = vpop.xlane.xlu0 %299
      %v301 = vmul.f32 %v210, %v292
      %v302 = vmul.f32 %v211, %v300
      %v303 = vadd.f32 %v301, %v302
      %304 = vst [vmem:[%s209] sm:$0xff] %v303
      %p305 = scmp.lt.s32.totalorder %s15, 1
      %s306 = scalar_select %p305, %s15, 1
      %s307 = smul.addr %s306, 8
      %s308 = scalar_lea.vmem %s4, %s307
      // Predicated region
      $region37: #{channel_select2.1} parent=35 // pred_check
        %p309 = pneg %p127
      $region38: #{channel_select2.1} parent=35 // pred_check_branch
        %311 = sbr.rel (%p309) target = $region40
      $region39: #{channel_select2.1} parent=35 // pred_region
        _
      $region40: #{channel_select2.1} parent=35 // pred_fallthru
        _
    $region36: #{channel_select2.1} parent=5 // pred_fallthru
      _
    %p312 = scmp.le.s32.totalorder 2, %s10
    // Predicated region
    $region41: #{channel_select2.1} parent=5 // pred_check
      %p313 = pneg %p312
    $region42: #{channel_select2.1} parent=5 // pred_check_branch
      %315 = sbr.rel (%p313) target = $region44
    $region43: #{channel_select2.1} parent=5 // pred_region
      %s316 = ssub.s32 %s10, 2
      // Predicated region
      $region45: #{channel_select2.1} parent=43 // pred_check
        %p317 = pneg %p133
      $region46: #{channel_select2.1} parent=43 // pred_check_branch
        %319 = sbr.rel (%p317) target = $region48
      $region47: #{channel_select2.1} parent=43 // pred_region
        %p320 = scmp.lt.s32.totalorder %s16, 1
        %s321 = scalar_select %p320, %s16, 1
        %s322 = smul.addr %s321, 8
        %s323 = scalar_lea.vmem %s4, %s322
      $region48: #{channel_select2.1} parent=43 // pred_fallthru
        _
    $region44: #{channel_select2.1} parent=5 // pred_fallthru
      _
  $region6: #{channel_select2.1} parent=0 // loop_footer
    %s14 = sadd.s32 1, %s10
  $region7: #{channel_select2.1} parent=0 // loop_footer_branch
    %9 = sbr.rel target = $region3
  $region8: #{channel_select2.1} parent=0 // loop_exit
    _

</llo_original>
